<compile_context>
chip_gen: v7x
topology: tpu7x:2x2x1
jax: 0.10.0
libtpu: 0.0.40
codegen_flags: <defaults>
</compile_context>

<pallas_src>
import functools

import jax
import jax.numpy as jnp
from jax.experimental import pallas as pl
from jax.experimental.pallas import tpu as pltpu


def _round_up(x, m):
    return ((x + m - 1) // m) * m


# ----------------------------- Pallas kernel --------------------------------
def _linear_kernel(x_ref, w_ref, b_ref, o_ref, *, activation):
    # x_ref: (TM, K), w_ref: (K, N), b_ref: (1, N), o_ref: (TM, N)
    y = jnp.dot(x_ref[...], w_ref[...], preferred_element_type=jnp.float32)
    y = y + b_ref[...]
    if activation == "relu":
        y = jnp.maximum(y, 0.0)
    o_ref[...] = y.astype(o_ref.dtype)


def pallas_linear(x2d, w, b, activation=None, tm=512):
    """y = act(x2d @ w + b), row-tiled Pallas kernel (rows on sublanes,
    features on lanes)."""
    M, K = x2d.shape
    Kw, N = w.shape
    assert K == Kw

    # Row tile: multiple of 8 (sublane granularity), capped at `tm`.
    TM = min(tm, _round_up(M, 8))
    M_pad = _round_up(M, TM)
    if M_pad != M:
        x2d = jnp.pad(x2d, ((0, M_pad - M), (0, 0)))

    kernel = functools.partial(_linear_kernel, activation=activation)
    out = pl.pallas_call(
        kernel,
        out_shape=jax.ShapeDtypeStruct((M_pad, N), jnp.float32),
        grid=(M_pad // TM,),
        in_specs=[
            pl.BlockSpec((TM, K), lambda i: (i, 0)),   # row tile, pipelined
            pl.BlockSpec((K, N), lambda i: (0, 0)),    # weights resident
            pl.BlockSpec((1, N), lambda i: (0, 0)),    # bias resident
        ],
        out_specs=pl.BlockSpec((TM, N), lambda i: (i, 0)),
        compiler_params=pltpu.CompilerParams(
            dimension_semantics=("parallel",),          # megacore on v7x
            vmem_limit_bytes=64 << 20,
        ),
    )(x2d, w, b.reshape(1, N))

    return out[:M] if M_pad != M else out
    # TODO(synk): for bf16-tolerant models, cast x/w to bf16 (keep f32
    # accumulation via preferred_element_type) to halve HBM traffic.


# ------------------------------ SequenceWise ---------------------------------
def sequence_wise(x, module_fn):
    """Collapse (T, B, F) -> (T*B, F), apply module_fn, reshape to (T, B, -1)."""
    T, B = x.shape[:2]
    x2d = x.reshape(T * B, -1)
    y = module_fn(x2d)
    return y.reshape(T, B, -1)


# --------------------------- parameter creation ------------------------------
def init_params(key, d_in, d_out):
    kw, kb = jax.random.split(key, 2)
    return {
        "w": jax.random.normal(kw, (d_in, d_out), jnp.float32) * 0.05,
        "b": jax.random.normal(kb, (d_out,), jnp.float32) * 0.05,
    }


# ------------------------------ reference (JAX) -------------------------------
def reference_forward(x, params, activation=None):
    T, B = x.shape[:2]
    y = x.reshape(T * B, -1) @ params["w"] + params["b"]
    if activation == "relu":
        y = jnp.maximum(y, 0.0)
    return y.reshape(T, B, -1)


# ---------------------------------- main --------------------------------------
if __name__ == "__main__":
    key = jax.random.PRNGKey(0)
    k_x, k_p = jax.random.split(key, 2)

    # (T, B, D_in) -> (T, B, D_out).  Feature dims are multiples of 128 so
    # every load/store is lane-dense (unmasked full-width vst).
    T, B, D_IN, D_OUT = 8, 2, 128, 128
    ACT = None  # SequenceWise wraps a plain Linear here

    x = jax.random.normal(k_x, (T, B, D_IN), jnp.float32)
    params = init_params(k_p, D_IN, D_OUT)

    module_fn = lambda x2d: pallas_linear(x2d, params["w"], params["b"], ACT)
    out = sequence_wise(x, module_fn)
    out = jax.block_until_ready(out)

    ref = reference_forward(x, params, ACT)
    assert out.shape == (T, B, D_OUT)
    assert jnp.allclose(out, ref, atol=1e-5, rtol=1e-5)

    print("KERNEL_OK")
</pallas_src>

<mosaic_0001>
module attributes {stable_mosaic.version = 11 : i64} {
  func.func @_linear_kernel(%arg0: i32, %arg1: memref<16x128xf32, #tpu.memory_space<vmem>>, %arg2: memref<128x128xf32, #tpu.memory_space<vmem>>, %arg3: memref<1x128xf32, #tpu.memory_space<vmem>>, %arg4: memref<16x128xf32, #tpu.memory_space<vmem>>) attributes {dimension_semantics = [#tpu.dimension_semantics<parallel>], iteration_bounds = array<i64: 1>, scalar_prefetch = 0 : i64, scratch_operands = 0 : i64, tpu.core_type = #tpu.core_type<tc>, window_params = [{transform_indices = @transform_0, window_bounds = array<i64: 16, 128>}, {pipeline_mode = #tpu.pipeline_mode<synchronous>, transform_indices = @transform_1, window_bounds = array<i64: 128, 128>}, {pipeline_mode = #tpu.pipeline_mode<synchronous>, transform_indices = @transform_2, window_bounds = array<i64: 1, 128>}, {transform_indices = @transform_3, window_bounds = array<i64: 16, 128>}]} {
    %c0 = arith.constant 0 : index
    %c0_0 = arith.constant 0 : index
    %0 = vector.load %arg1[%c0, %c0_0] : memref<16x128xf32, #tpu.memory_space<vmem>>, vector<16x128xf32>
    %c0_1 = arith.constant 0 : index
    %c0_2 = arith.constant 0 : index
    %1 = vector.load %arg2[%c0_1, %c0_2] : memref<128x128xf32, #tpu.memory_space<vmem>>, vector<128x128xf32>
    %cst = arith.constant dense<0.000000e+00> : vector<16x128xf32>
    %2 = tpu.matmul %0, %1, %cst {dimension_numbers = #tpu.dot_dimension_numbers<[1], [0], [0], [1], [0, 0, 1, 1], [], []>} : vector<16x128xf32>, vector<128x128xf32>, vector<16x128xf32> -> vector<16x128xf32>
    %c0_3 = arith.constant 0 : index
    %c0_4 = arith.constant 0 : index
    %3 = vector.load %arg3[%c0_3, %c0_4] : memref<1x128xf32, #tpu.memory_space<vmem>>, vector<1x128xf32>
    %4 = vector.broadcast %3 : vector<1x128xf32> to vector<16x128xf32>
    %5 = arith.addf %2, %4 : vector<16x128xf32>
    %c0_5 = arith.constant 0 : index
    %c0_6 = arith.constant 0 : index
    %6 = vector.load %arg4[%c0_5, %c0_6] : memref<16x128xf32, #tpu.memory_space<vmem>>, vector<16x128xf32>
    tpu.vector_store %arg4[%c0_5, %c0_6], %5 {strides = array<i32>} : memref<16x128xf32, #tpu.memory_space<vmem>>, vector<16x128xf32>,
    return
  }
  func.func @transform_0(%arg0: i32) -> (i32, i32) {
    %c0_i32 = arith.constant 0 : i32
    %c0_i32_0 = arith.constant 0 : i32
    return %arg0, %c0_i32 : i32, i32
  }
  func.func @transform_1(%arg0: i32) -> (i32, i32) {
    %c0_i32 = arith.constant 0 : i32
    %c0_i32_0 = arith.constant 0 : i32
    %c0_i32_1 = arith.constant 0 : i32
    return %c0_i32, %c0_i32_0 : i32, i32
  }
  func.func @transform_2(%arg0: i32) -> (i32, i32) {
    %c0_i32 = arith.constant 0 : i32
    %c0_i32_0 = arith.constant 0 : i32
    %c0_i32_1 = arith.constant 0 : i32
    return %c0_i32, %c0_i32_0 : i32, i32
  }
  func.func @transform_3(%arg0: i32) -> (i32, i32) {
    %c0_i32 = arith.constant 0 : i32
    %c0_i32_0 = arith.constant 0 : i32
    return %arg0, %c0_i32 : i32, i32
  }
}

</mosaic_0001>

<llo_original>
// kernel: tpu_custom_call.1
$region0: #{tpu_custom_call.1}
  #allocation0 [shape = 'u32[]', space=smem, size = 0x4, offset = 0x4, fixed_abs, tag = 'smem constant byte address 0x4 - core index']
  #allocation1 [shape = 'u32[144,128]{1,0:T(1,128)}', space=vmem, size = 0x12000, scoped, tag = 'internal scratch']
  %s0 = inlined_call_operand.hbm [shape: f32[16,128], index: 0, kind: input, shape index: {}]
  %s1 = inlined_call_operand.hbm [shape: f32[128,128], index: 1, kind: input, shape index: {}]
  %s2 = inlined_call_operand.hbm [shape: f32[1,128], index: 2, kind: input, shape index: {}]
  %s3 = inlined_call_operand.hbm [shape: f32[16,128], index: 3, kind: output, shape index: {}]
  %s4 = sld [smem:[#allocation0]]
  $region34: #{tpu_custom_call.1} parent=0
    _
  %s6 = ssub.s32 1, %s4
  %s7 = scalar_select 0, %s6, %s4
  $region1: #{tpu_custom_call.1} parent=0
    #allocation2 [shape = 'u8[8192]{0}', space=vmem, size = 0x2000, scoped, tag = 'input window, operand 0, single buffered']
    #allocation3 [shape = 's32[1]{0}', space=sflag, size = 0x4, scoped, tag = 'scoped memory for tpu_custom_call.1']
    #allocation4 [shape = 's32[1]{0}', space=sflag, size = 0x4, scoped, tag = 'scoped memory for tpu_custom_call.1']
    #allocation5 [shape = 'u8[65536]{0}', space=vmem, size = 0x10000, scoped, tag = 'input window, operand 1, single buffered']
    #allocation6 [shape = 's32[1]{0}', space=sflag, size = 0x4, scoped, tag = 'scoped memory for tpu_custom_call.1']
    #allocation7 [shape = 'u8[512]{0}', space=vmem, size = 0x400, scoped, tag = 'input window, operand 2, single buffered']
    #allocation8 [shape = 'u8[8192]{0}', space=vmem, size = 0x2000, scoped, tag = 'output window, operand 0, single buffered']
    %8 = vsyncpa [#allocation3], 0
    %9 = vsyncpa [#allocation6], 0
    %10 = vsyncpa [#allocation4], 0
    // Predicated region
    $region2: #{tpu_custom_call.1} parent=1 // pred_check
      _
    $region3: #{tpu_custom_call.1} parent=1 // pred_check_branch
      %12 = sbr.rel (0) target = $region5
    $region4: #{tpu_custom_call.1} parent=1 // pred_region
      %s14 = ssub.s32 256, 256
      %15 = vsyncadd [#allocation3], %s14
      %s16 = sshll.u32 [#allocation2], 4
      %s17 = int_to_ptr.vmem [resolvable:$true] %s16
      %22 = dma.hbm_to_vmem [thread:$0]  %s0, 256, %s17, [#allocation3], 128, 128, 8
    $region5: #{tpu_custom_call.1} parent=1 // pred_fallthru
      _
    // Predicated region
    $region6: #{tpu_custom_call.1} parent=1 // pred_check
      _
    $region7: #{tpu_custom_call.1} parent=1 // pred_check_branch
      %24 = sbr.rel (0) target = $region9
    $region8: #{tpu_custom_call.1} parent=1 // pred_region
      %s26 = ssub.s32 2048, 2048
      %27 = vsyncadd [#allocation6], %s26
      %s28 = sshll.u32 [#allocation5], 4
      %s29 = int_to_ptr.vmem [resolvable:$true] %s28
      %34 = dma.hbm_to_vmem [thread:$0]  %s1, 2048, %s29, [#allocation6], 128, 128, 8
    $region9: #{tpu_custom_call.1} parent=1 // pred_fallthru
      _
    // Predicated region
    $region10: #{tpu_custom_call.1} parent=1 // pred_check
      _
    $region11: #{tpu_custom_call.1} parent=1 // pred_check_branch
      %36 = sbr.rel (0) target = $region13
    $region12: #{tpu_custom_call.1} parent=1 // pred_region
      %s38 = ssub.s32 16, 16
      %39 = vsyncadd [#allocation6], %s38
      %s41 = sshll.u32 [#allocation7], 4
      %s42 = int_to_ptr.vmem [resolvable:$true] %s41
      %44 = dma.hbm_to_vmem [thread:$0]  %s2, 16, %s42, [#allocation6]
    $region13: #{tpu_custom_call.1} parent=1 // pred_fallthru
      _
    // Predicated region
    $region14: #{tpu_custom_call.1} parent=1 // pred_check
      _
    $region15: #{tpu_custom_call.1} parent=1 // pred_check_branch
      %46 = sbr.rel (0) target = $region17
    $region16: #{tpu_custom_call.1} parent=1 // pred_region
      %47 = dma.done [#allocation3], 256
    $region17: #{tpu_custom_call.1} parent=1 // pred_fallthru
      _
    // Predicated region
    $region18: #{tpu_custom_call.1} parent=1 // pred_check
      _
    $region19: #{tpu_custom_call.1} parent=1 // pred_check_branch
      %49 = sbr.rel (0) target = $region21
    $region20: #{tpu_custom_call.1} parent=1 // pred_region
      %50 = dma.done [#allocation6], 2048
    $region21: #{tpu_custom_call.1} parent=1 // pred_fallthru
      _
    // Predicated region
    $region22: #{tpu_custom_call.1} parent=1 // pred_check
      _
    $region23: #{tpu_custom_call.1} parent=1 // pred_check_branch
      %52 = sbr.rel (0) target = $region25
    $region24: #{tpu_custom_call.1} parent=1 // pred_region
      %53 = dma.done [#allocation6], 16
    $region25: #{tpu_custom_call.1} parent=1 // pred_fallthru
      _
    %v54 = vld [vmem:[#allocation2] sm:$0xff]
    %v55 = vld [vmem:[#allocation2 + $0x8] sm:$0xff]
    %v56 = vld [vmem:[#allocation5] sm:$0xff]
    %v57 = vld [vmem:[#allocation5 + $0x8] sm:$0xff]
    %v58 = vld [vmem:[#allocation5 + $0x10] sm:$0xff]
    %v59 = vld [vmem:[#allocation5 + $0x18] sm:$0xff]
    %v60 = vld [vmem:[#allocation5 + $0x20] sm:$0xff]
    %v61 = vld [vmem:[#allocation5 + $0x28] sm:$0xff]
    %v62 = vld [vmem:[#allocation5 + $0x30] sm:$0xff]
    %v63 = vld [vmem:[#allocation5 + $0x38] sm:$0xff]
    %v64 = vld [vmem:[#allocation5 + $0x40] sm:$0xff]
    %v65 = vld [vmem:[#allocation5 + $0x48] sm:$0xff]
    %v66 = vld [vmem:[#allocation5 + $0x50] sm:$0xff]
    %v67 = vld [vmem:[#allocation5 + $0x58] sm:$0xff]
    %v68 = vld [vmem:[#allocation5 + $0x60] sm:$0xff]
    %v69 = vld [vmem:[#allocation5 + $0x68] sm:$0xff]
    %v70 = vld [vmem:[#allocation5 + $0x70] sm:$0xff]
    %v71 = vld [vmem:[#allocation5 + $0x78] sm:$0xff]
    %v72 = vld [vmem:[#allocation7] sm:$0x1]
    %v74 = vlaneseq
    %v75 = vshrl.u32 %v74, 7
    %v76 = vsub.s32 0, %v75
    %v77 = vrot.slane %v72, %v76
    %79 = vmatprep.subr.mxu0 0.0
    %80 = vmatpush1.msra.mxu0 %v56
    %81 = vmatprep.subr.mxu0 0.0
    %82 = vmatpush1.msra.mxu0 %v57
    %83 = vmatprep.subr.mxu0 0.0
    %84 = vmatpush1.msra.mxu0 %v58
    %85 = vmatprep.subr.mxu0 0.0
    %86 = vmatpush1.msra.mxu0 %v59
    %87 = vmatprep.subr.mxu0 0.0
    %88 = vmatpush1.msra.mxu0 %v60
    %89 = vmatprep.subr.mxu0 0.0
    %90 = vmatpush1.msra.mxu0 %v61
    %91 = vmatprep.subr.mxu0 0.0
    %92 = vmatpush1.msra.mxu0 %v62
    %93 = vmatprep.subr.mxu0 0.0
    %94 = vmatpush1.msra.mxu0 %v63
    %95 = vmatprep.subr.mxu0 0.0
    %96 = vmatpush1.msra.mxu0 %v64
    %97 = vmatprep.subr.mxu0 0.0
    %98 = vmatpush1.msra.mxu0 %v65
    %99 = vmatprep.subr.mxu0 0.0
    %100 = vmatpush1.msra.mxu0 %v66
    %101 = vmatprep.subr.mxu0 0.0
    %102 = vmatpush1.msra.mxu0 %v67
    %103 = vmatprep.subr.mxu0 0.0
    %104 = vmatpush1.msra.mxu0 %v68
    %105 = vmatprep.subr.mxu0 0.0
    %106 = vmatpush1.msra.mxu0 %v69
    %107 = vmatprep.subr.mxu0 0.0
    %108 = vmatpush1.msra.mxu0 %v70
    %109 = vmatprep.subr.mxu0 0.0
    %110 = vmatpush1.msra.mxu0 %v71
    %111 = vmatprep.subr.mxu0 0.0
    %112 = vmatpush1.msra.mxu0 0.0
    %113 = vmatprep.subr.mxu0 0.0
    %114 = vmatpush1.msra.mxu0 0.0
    %115 = vmatprep.subr.mxu0 0.0
    %116 = vmatpush1.msra.mxu0 0.0
    %117 = vmatprep.subr.mxu0 0.0
    %118 = vmatpush1.msra.mxu0 0.0
    %119 = vmatprep.subr.mxu0 0.0
    %120 = vmatpush1.msra.mxu0 0.0
    %121 = vmatprep.subr.mxu0 0.0
    %122 = vmatpush1.msra.mxu0 0.0
    %123 = vmatprep.subr.mxu0 0.0
    %124 = vmatpush1.msra.mxu0 0.0
    %125 = vmatprep.subr.mxu0 0.0
    %126 = vmatpush1.msra.mxu0 0.0
    %127 = vmatprep.subr.mxu0 0.0
    %128 = vmatpush1.msra.mxu0 0.0
    %129 = vmatprep.subr.mxu0 0.0
    %130 = vmatpush1.msra.mxu0 0.0
    %131 = vmatprep.subr.mxu0 0.0
    %132 = vmatpush1.msra.mxu0 0.0
    %133 = vmatprep.subr.mxu0 0.0
    %134 = vmatpush1.msra.mxu0 0.0
    %135 = vmatprep.subr.mxu0 0.0
    %136 = vmatpush1.msra.mxu0 0.0
    %137 = vmatprep.subr.mxu0 0.0
    %138 = vmatpush1.msra.mxu0 0.0
    %139 = vmatprep.subr.mxu0 0.0
    %140 = vmatpush1.msra.mxu0 0.0
    %141 = vmatprep.subr.mxu0 0.0
    %142 = vmatpush1.msra.mxu0 0.0
    %143 = vmatprep.mubr.f32.mxu0 0.0
    %144 = vmatmul.mubr.f32.gmra.mrb[0].mxu0 %v54
    %v145 = vpop.f32.mrb[0].mxu0
    %v146 = vadd.f32 %v77, %v145
    %v147 = vpop.f32.mrb[0].mxu0
    %148 = vmatprep.mubr.f32.mxu0 0.0
    %149 = vmatmul.mubr.f32.gmra.mrb[0].mxu0 %v55
    %v150 = vpop.f32.mrb[0].mxu0
    %v151 = vadd.f32 %v77, %v150
    %v152 = vpop.f32.mrb[0].mxu0
    %153 = vdwg.mxu0
    %154 = vst [vmem:[#allocation8] sm:$0xff] %v146
    %155 = vst [vmem:[#allocation8 + $0x8] sm:$0xff] %v151
    // Predicated region
    $region26: #{tpu_custom_call.1} parent=1 // pred_check
      _
    $region27: #{tpu_custom_call.1} parent=1 // pred_check_branch
      %157 = sbr.rel (0) target = $region29
    $region28: #{tpu_custom_call.1} parent=1 // pred_region
      %s159 = ssub.s32 256, 256
      %160 = vsyncadd [#allocation4], %s159
      %s161 = sshll.u32 [#allocation8], 4
      %s162 = int_to_ptr.vmem [resolvable:$true] %s161
      %167 = dma.vmem_to_hbm [thread:$0]  %s162, 256, %s3, [#allocation4], 128, 128, 8
    $region29: #{tpu_custom_call.1} parent=1 // pred_fallthru
      _
    // Predicated region
    $region30: #{tpu_custom_call.1} parent=1 // pred_check
      _
    $region31: #{tpu_custom_call.1} parent=1 // pred_check_branch
      %169 = sbr.rel (0) target = $region33
    $region32: #{tpu_custom_call.1} parent=1 // pred_region
      %170 = dma.done [#allocation4], 256
    $region33: #{tpu_custom_call.1} parent=1 // pred_fallthru
      _
    %171 = vsyncpa [#allocation3], 1
    %172 = vsyncpa [#allocation6], 1
    %173 = vsyncpa [#allocation4], 1

</llo_original>
